<compile_context>
chip_gen: v7x
topology: tpu7x:2x2x1
jax: 0.10.0
libtpu: 0.0.40
codegen_flags: <defaults>
</compile_context>

<pallas_src>
import jax
import jax.numpy as jnp
from jax.experimental import pallas as pl
from jax.experimental.pallas import tpu as pltpu

LANE = 128                     # lane width (last dim of the vreg tile)
SUBLANE = 8                    # sublanes per f32 vreg
BLOCK_BYTES = 4 * 1024 * 1024  # HBM bytes per input per grid step (4 MiB)
CHUNK_BYTES = 256 * 1024       # bytes per input per in-kernel fold chunk
VMEM_LIMIT_BYTES = 32 * 1024 * 1024
FASTPATH_BYTES = 1 << 20       # below this per-tensor size, skip Pallas


def _make_fm_loss_kernel(tm, chunk):
    """Kernel body. tm (rows/block) and chunk (rows/fold-chunk) are static,
    both multiples of SUBLANE, chunk <= tm."""
    n_chunks = tm // chunk
    rem = tm - n_chunks * chunk   # multiple of SUBLANE

    def fold(o_c, l_c):
        # (r, 128) -> (8, 128): diff, square, then tile-aligned folding adds
        # (whole-vreg adds on the VPU; no cross-lane/XLU reduce per step).
        d = o_c.astype(jnp.float32) - l_c.astype(jnp.float32)
        dsq = d * d
        r = dsq.shape[0]
        return dsq.reshape(r // SUBLANE, SUBLANE, LANE).sum(axis=0)

    def kernel(o_ref, l_ref, out_ref):
        # Output block index depends only on the parallel axis, so this
        # (8,128) block stays VMEM-resident across the reduction axis and
        # acts as a per-core vector accumulator.
        @pl.when(pl.program_id(1) == 0)
        def _():
            out_ref[...] = jnp.zeros_like(out_ref)

        if n_chunks == 1 and rem == 0:
            acc = fold(o_ref[pl.ds(0, chunk), :], l_ref[pl.ds(0, chunk), :])
        else:
            def body(c, a):
                r0 = pl.multiple_of(c * chunk, chunk)
                return a + fold(o_ref[pl.ds(r0, chunk), :],
                                l_ref[pl.ds(r0, chunk), :])

            acc = jax.lax.fori_loop(0, n_chunks, body,
                                    jnp.zeros((SUBLANE, LANE), jnp.float32))
            if rem > 0:
                r0 = n_chunks * chunk
                acc = acc + fold(o_ref[pl.ds(r0, rem), :],
                                 l_ref[pl.ds(r0, rem), :])

        out_ref[...] += acc

    return kernel


def fm_loss(output, label, *, min_kernel_bytes=FASTPATH_BYTES):
    """sum((output - label)**2), computed in a Pallas TPU kernel (f32 acc)."""
    assert output.shape == label.shape, "output/label shapes must match"

    o_flat = output.reshape(-1)
    l_flat = label.reshape(-1)
    n = o_flat.shape[0]
    if n == 0:
        return jnp.zeros((), jnp.float32)

    itemsize = jnp.dtype(output.dtype).itemsize

    # Fast path: tiny inputs are pure launch/grid overhead in a pallas_call.
    if n * itemsize < min_kernel_bytes:
        d = o_flat.astype(jnp.float32) - l_flat.astype(jnp.float32)
        return jnp.sum(d * d)

    # Pad only when the element count is not a multiple of one (8,128) vreg
    # tile (1024 elements); padded entries are 0 in both tensors, so they
    # contribute (0-0)^2 = 0.  Typical feature-map sizes never trigger this.
    tile = SUBLANE * LANE
    n_pad = pl.cdiv(n, tile) * tile
    if n_pad != n:
        o_flat = jnp.pad(o_flat, (0, n_pad - n))
        l_flat = jnp.pad(l_flat, (0, n_pad - n))

    rows = n_pad // LANE                 # multiple of SUBLANE
    o2 = o_flat.reshape(rows, LANE)
    l2 = l_flat.reshape(rows, LANE)

    # Rows per block from a byte budget: f32 -> 8192 rows, bf16 -> 16384 rows.
    tm_max = max(SUBLANE, (BLOCK_BYTES // (LANE * itemsize)) // SUBLANE * SUBLANE)

    if rows <= tm_max:
        p, t, tm = 1, 1, rows            # single full block
    else:
        # 2-way parallel outer axis, every block full and identically sized;
        # a few leftover rows (< ~9 per block) go to the wrapper residual sum.
        p = 2
        t = pl.cdiv(rows, p * tm_max)    # blocks per core
        nb = p * t
        tm = (rows // nb) // SUBLANE * SUBLANE
    rows_kernel = p * t * tm             # rows covered by the kernel

    # In-kernel fold chunk: ~256 KiB of input per chunk keeps temporaries
    # bounded (no multi-MiB VMEM temp) while the loop stays short (~16 iters).
    chunk = max(SUBLANE, (CHUNK_BYTES // (LANE * itemsize)) // SUBLANE * SUBLANE)
    chunk = min(chunk, tm)

    def in_map(pi, ii):
        return (pi * t + ii, 0)

    partials = pl.pallas_call(
        _make_fm_loss_kernel(tm, chunk),
        out_shape=jax.ShapeDtypeStruct((p * SUBLANE, LANE), jnp.float32),
        grid_spec=pltpu.PrefetchScalarGridSpec(
            num_scalar_prefetch=0,
            grid=(p, t),                                  # reduction axis last
            in_specs=[pl.BlockSpec((tm, LANE), in_map),
                      pl.BlockSpec((tm, LANE), in_map)],
            out_specs=pl.BlockSpec((SUBLANE, LANE), lambda pi, ii: (pi, 0)),
        ),
        compiler_params=pltpu.CompilerParams(
            # TODO(synk): verify on v7x that the p=2 axis lands on both
            # TensorCores; if not, switch the outer axis to pltpu.CORE_PARALLEL.
            dimension_semantics=("parallel", "arbitrary"),
            vmem_limit_bytes=VMEM_LIMIT_BYTES,
        ),
    )(o2, l2)

    # Tiny final cross-lane/sublane reduce over the per-core partial sums.
    loss = jnp.sum(partials)

    # Ragged tail (rows not covered by full, evenly split blocks): a small
    # fused XLA reduction over the leftover slice.
    if rows_kernel != rows:
        d_res = (o2[rows_kernel:].astype(jnp.float32)
                 - l2[rows_kernel:].astype(jnp.float32))
        loss = loss + jnp.sum(d_res * d_res)

    return loss


if __name__ == "__main__":
    key = jax.random.PRNGKey(0)

    def check(shape, k, dtype=jnp.float32, rtol=1e-4, atol=1e-5, **kw):
        k1, k2 = jax.random.split(k)
        output = jax.random.normal(k1, shape, dtype=dtype)
        label = jax.random.normal(k2, shape, dtype=dtype)
        loss = fm_loss(output, label, **kw)
        jax.block_until_ready(loss)
        ref = jnp.sum(jnp.square(output.astype(jnp.float32)
                                 - label.astype(jnp.float32)))
        assert jnp.allclose(loss, ref, rtol=rtol, atol=atol), (shape, loss, ref)

    k0, k1, k2, k3, k4 = jax.random.split(key, 5)
    # Primary small NCHW case (like the PyTorch module's feature maps):
    # default path -> fused XLA fast path.
    check((2, 4, 16, 16), k0)
    # Same small case forced through the Pallas kernel (single tiny block).
    check((2, 4, 16, 16), k1, min_kernel_bytes=0)
    # Unaligned element count forced through the kernel: exercises the pad path.
    check((2, 3, 15, 15), k2, min_kernel_bytes=0)
    # Larger case: kernel path, single block, multi-chunk in-kernel fold.
    check((8, 8, 96, 96), k3)
    # Larger still: 2-way 'parallel' split + wrapper residual-row sum.
    check((1025, 1024), k4)

    print("KERNEL_OK")
</pallas_src>

<mosaic_0001>
module attributes {stable_mosaic.version = 11 : i64} {
  func.func @kernel(%arg0: i32, %arg1: i32, %arg2: memref<16x128xf32, #tpu.memory_space<vmem>>, %arg3: memref<16x128xf32, #tpu.memory_space<vmem>>, %arg4: memref<8x128xf32, #tpu.memory_space<vmem>>) attributes {dimension_semantics = [#tpu.dimension_semantics<parallel>, #tpu.dimension_semantics<arbitrary>], iteration_bounds = array<i64: 1, 1>, scalar_prefetch = 0 : i64, scratch_operands = 0 : i64, tpu.core_type = #tpu.core_type<tc>, window_params = [{transform_indices = @transform_0, window_bounds = array<i64: 16, 128>}, {transform_indices = @transform_1, window_bounds = array<i64: 16, 128>}, {transform_indices = @transform_2, window_bounds = array<i64: 8, 128>}]} {
    %c0_i32 = arith.constant 0 : i32
    %0 = arith.cmpi eq, %arg1, %c0_i32 : i32
    %1 = arith.extui %0 : i1 to i32
    %c0_i32_0 = arith.constant 0 : i32
    %2 = arith.cmpi ne, %1, %c0_i32_0 : i32
    scf.if %2 {
      %cst_8 = arith.constant 0.000000e+00 : f32
      %12 = vector.broadcast %cst_8 : f32 to vector<8x128xf32>
      %c0_9 = arith.constant 0 : index
      %c0_10 = arith.constant 0 : index
      %13 = vector.load %arg4[%c0_9, %c0_10] : memref<8x128xf32, #tpu.memory_space<vmem>>, vector<8x128xf32>
      tpu.vector_store %arg4[%c0_9, %c0_10], %12 {strides = array<i32>} : memref<8x128xf32, #tpu.memory_space<vmem>>, vector<8x128xf32>,
    } else {
    }
    %c0 = arith.constant 0 : index
    %c0_1 = arith.constant 0 : index
    %3 = vector.load %arg2[%c0, %c0_1] : memref<16x128xf32, #tpu.memory_space<vmem>>, vector<16x128xf32>
    %c0_2 = arith.constant 0 : index
    %c0_3 = arith.constant 0 : index
    %4 = vector.load %arg3[%c0_2, %c0_3] : memref<16x128xf32, #tpu.memory_space<vmem>>, vector<16x128xf32>
    %5 = arith.subf %3, %4 : vector<16x128xf32>
    %6 = arith.mulf %5, %5 : vector<16x128xf32>
    %7 = vector.shape_cast %6 : vector<16x128xf32> to vector<2x8x128xf32>
    %cst = arith.constant dense<0.000000e+00> : vector<8x128xf32>
    %8 = vector.multi_reduction <add>, %7, %cst [0] : vector<2x8x128xf32> to vector<8x128xf32>
    %c0_4 = arith.constant 0 : index
    %c0_5 = arith.constant 0 : index
    %9 = vector.load %arg4[%c0_4, %c0_5] : memref<8x128xf32, #tpu.memory_space<vmem>>, vector<8x128xf32>
    %10 = arith.addf %9, %8 : vector<8x128xf32>
    %c0_6 = arith.constant 0 : index
    %c0_7 = arith.constant 0 : index
    %11 = vector.load %arg4[%c0_6, %c0_7] : memref<8x128xf32, #tpu.memory_space<vmem>>, vector<8x128xf32>
    tpu.vector_store %arg4[%c0_6, %c0_7], %10 {strides = array<i32>} : memref<8x128xf32, #tpu.memory_space<vmem>>, vector<8x128xf32>,
    return
  }
  func.func @transform_0(%arg0: i32, %arg1: i32) -> (i32, i32) {
    %c1_i32 = arith.constant 1 : i32
    %0 = arith.muli %arg0, %c1_i32 : i32
    %1 = arith.addi %0, %arg1 : i32
    %c0_i32 = arith.constant 0 : i32
    %c0_i32_0 = arith.constant 0 : i32
    return %1, %c0_i32 : i32, i32
  }
  func.func @transform_1(%arg0: i32, %arg1: i32) -> (i32, i32) {
    %c1_i32 = arith.constant 1 : i32
    %0 = arith.muli %arg0, %c1_i32 : i32
    %1 = arith.addi %0, %arg1 : i32
    %c0_i32 = arith.constant 0 : i32
    %c0_i32_0 = arith.constant 0 : i32
    return %1, %c0_i32 : i32, i32
  }
  func.func @transform_2(%arg0: i32, %arg1: i32) -> (i32, i32) {
    %c0_i32 = arith.constant 0 : i32
    %c0_i32_0 = arith.constant 0 : i32
    return %arg0, %c0_i32 : i32, i32
  }
}

</mosaic_0001>

<llo_original>
// kernel: tpu_custom_call.1
$region0: #{tpu_custom_call.1}
  #allocation0 [shape = 'u32[]', space=smem, size = 0x4, offset = 0x4, fixed_abs, tag = 'smem constant byte address 0x4 - core index']
  #allocation1 [shape = 'u32[144,128]{1,0:T(1,128)}', space=vmem, size = 0x12000, scoped, tag = 'internal scratch']
  %s0 = inlined_call_operand.hbm [shape: f32[16,128], index: 0, kind: input, shape index: {}]
  %s1 = inlined_call_operand.hbm [shape: f32[16,128], index: 1, kind: input, shape index: {}]
  %s2 = inlined_call_operand.hbm [shape: f32[8,128], index: 2, kind: output, shape index: {}]
  %s3 = sld [smem:[#allocation0]]
  $region30: #{tpu_custom_call.1} parent=0
    _
  %s5 = ssub.s32 1, %s3
  %s6 = scalar_select 0, %s5, %s3
  $region1: #{tpu_custom_call.1} parent=0
    #allocation2 [shape = 'u8[8192]{0}', space=vmem, size = 0x2000, scoped, tag = 'input window, operand 0, single buffered']
    #allocation3 [shape = 's32[1]{0}', space=sflag, size = 0x4, scoped, tag = 'scoped memory for tpu_custom_call.1']
    #allocation4 [shape = 's32[1]{0}', space=sflag, size = 0x4, scoped, tag = 'scoped memory for tpu_custom_call.1']
    #allocation5 [shape = 'u8[8192]{0}', space=vmem, size = 0x2000, scoped, tag = 'input window, operand 1, single buffered']
    #allocation6 [shape = 's32[1]{0}', space=sflag, size = 0x4, scoped, tag = 'scoped memory for tpu_custom_call.1']
    #allocation7 [shape = 'u8[4096]{0}', space=vmem, size = 0x1000, scoped, tag = 'output window, operand 0, single buffered']
    %7 = vsyncpa [#allocation3], 0
    %8 = vsyncpa [#allocation6], 0
    %9 = vsyncpa [#allocation4], 0
    // Predicated region
    $region2: #{tpu_custom_call.1} parent=1 // pred_check
      _
    $region3: #{tpu_custom_call.1} parent=1 // pred_check_branch
      %11 = sbr.rel (0) target = $region5
    $region4: #{tpu_custom_call.1} parent=1 // pred_region
      %s12 = sadd.s32 0, 0
      %s13 = smul.u32 2, %s12
      %s15 = ssub.s32 256, 256
      %16 = vsyncadd [#allocation3], %s15
      %s17 = smul.addr %s13, 128
      %s18 = scalar_lea.hbm %s0, %s17
      %s19 = sshll.u32 [#allocation2], 4
      %s20 = int_to_ptr.vmem [resolvable:$true] %s19
      %25 = dma.hbm_to_vmem [thread:$0]  %s18, 256, %s20, [#allocation3], 128, 128, 8
    $region5: #{tpu_custom_call.1} parent=1 // pred_fallthru
      _
    // Predicated region
    $region6: #{tpu_custom_call.1} parent=1 // pred_check
      _
    $region7: #{tpu_custom_call.1} parent=1 // pred_check_branch
      %27 = sbr.rel (0) target = $region9
    $region8: #{tpu_custom_call.1} parent=1 // pred_region
      %s28 = sadd.s32 0, 0
      %s29 = smul.u32 2, %s28
      %s31 = ssub.s32 256, 256
      %32 = vsyncadd [#allocation6], %s31
      %s33 = smul.addr %s29, 128
      %s34 = scalar_lea.hbm %s1, %s33
      %s35 = sshll.u32 [#allocation5], 4
      %s36 = int_to_ptr.vmem [resolvable:$true] %s35
      %41 = dma.hbm_to_vmem [thread:$0]  %s34, 256, %s36, [#allocation6], 128, 128, 8
    $region9: #{tpu_custom_call.1} parent=1 // pred_fallthru
      _
    // Predicated region
    $region10: #{tpu_custom_call.1} parent=1 // pred_check
      _
    $region11: #{tpu_custom_call.1} parent=1 // pred_check_branch
      %43 = sbr.rel (0) target = $region13
    $region12: #{tpu_custom_call.1} parent=1 // pred_region
      %44 = dma.done [#allocation3], 256
    $region13: #{tpu_custom_call.1} parent=1 // pred_fallthru
      _
    // Predicated region
    $region14: #{tpu_custom_call.1} parent=1 // pred_check
      _
    $region15: #{tpu_custom_call.1} parent=1 // pred_check_branch
      %46 = sbr.rel (0) target = $region17
    $region16: #{tpu_custom_call.1} parent=1 // pred_region
      %47 = dma.done [#allocation6], 256
    $region17: #{tpu_custom_call.1} parent=1 // pred_fallthru
      _
    %s48 = sadd.s32 0, 0
    %s49 = smul.u32 2, %s48
    %s50 = sadd.s32 0, 0
    %s51 = smul.u32 2, %s50
    %p52 = scmp.eq.s32.totalorder 0, 0
    // Predicated region
    $region18: #{tpu_custom_call.1} parent=1 // pred_check
      %p53 = pneg %p52
    $region19: #{tpu_custom_call.1} parent=1 // pred_check_branch
      %55 = sbr.rel (%p53) target = $region21
    $region20: #{tpu_custom_call.1} parent=1 // pred_region
      %56 = vst [vmem:[#allocation7] sm:$0xff] 0.0
    $region21: #{tpu_custom_call.1} parent=1 // pred_fallthru
      _
    %v57 = vld [vmem:[#allocation2] sm:$0xff]
    %v58 = vld [vmem:[#allocation2 + $0x8] sm:$0xff]
    %v59 = vld [vmem:[#allocation5] sm:$0xff]
    %v60 = vld [vmem:[#allocation5 + $0x8] sm:$0xff]
    %v61 = vsub.f32 %v57, %v59
    %v62 = vsub.f32 %v58, %v60
    %v63 = vmul.f32 %v61, %v61
    %v64 = vmul.f32 %v62, %v62
    %v65 = vadd.f32 %v63, %v64
    %v66 = vld [vmem:[#allocation7] sm:$0xff]
    %v67 = vadd.f32 %v66, %v65
    %68 = vst [vmem:[#allocation7] sm:$0xff] %v67
    // Predicated region
    $region22: #{tpu_custom_call.1} parent=1 // pred_check
      _
    $region23: #{tpu_custom_call.1} parent=1 // pred_check_branch
      %70 = sbr.rel (0) target = $region25
    $region24: #{tpu_custom_call.1} parent=1 // pred_region
      %s72 = ssub.s32 128, 128
      %73 = vsyncadd [#allocation4], %s72
      %s75 = sshll.u32 [#allocation7], 4
      %s76 = int_to_ptr.vmem [resolvable:$true] %s75
      %78 = dma.vmem_to_hbm [thread:$0]  %s76, 128, %s2, [#allocation4]
    $region25: #{tpu_custom_call.1} parent=1 // pred_fallthru
      _
    // Predicated region
    $region26: #{tpu_custom_call.1} parent=1 // pred_check
      _
    $region27: #{tpu_custom_call.1} parent=1 // pred_check_branch
      %80 = sbr.rel (0) target = $region29
    $region28: #{tpu_custom_call.1} parent=1 // pred_region
      %81 = dma.done [#allocation4], 128
    $region29: #{tpu_custom_call.1} parent=1 // pred_fallthru
      _
    %82 = vsyncpa [#allocation3], 1
    %83 = vsyncpa [#allocation6], 1
    %84 = vsyncpa [#allocation4], 1

</llo_original>
